<compile_context>
chip_gen: v7x
topology: tpu7x:2x2x1
jax: 0.10.0
libtpu: 0.0.40
codegen_flags: <defaults>
</compile_context>

<pallas_src>
import jax
import jax.numpy as jnp
from jax import lax
from jax.experimental import pallas as pl
from jax.experimental.pallas import tpu as pltpu

EPS = 1e-5


def _round_up(x, m):
    return (x + m - 1) // m * m


def stats_kernel(x_ref, w_ref, stats_ref):
    # x_ref:     (tile_m, Cin)   bf16 (zero-padded tail rows are all-zero)
    # w_ref:     (Cin, c4)       bf16 (same block every grid step -> stays VMEM resident)
    # stats_ref: (1, 2, c4)      f32  row 0 = sum(y), row 1 = sum(y*y)
    x = jnp.maximum(x_ref[...], 0)                                   # ReLU (exact in bf16)
    y = jnp.dot(x, w_ref[...], preferred_element_type=jnp.float32)   # MXU, f32 accumulate
    s = jnp.sum(y, axis=0, keepdims=True)                            # (1, c4)
    sq = jnp.sum(y * y, axis=0, keepdims=True)                       # (1, c4)
    stats_ref[...] = jnp.concatenate([s, sq], axis=0)[None]          # direct 2-row write


def normalize_kernel(x_ref, w_ref, scale_ref, shift_ref, o_ref):
    # Recompute ReLU + matmul (arithmetic intensity is far below the compute-bound roofline,
    # so this is cheaper than writing + re-reading a f32 intermediate), then one fused
    # full-width, lane-dense multiply-add store.
    x = jnp.maximum(x_ref[...], 0)
    y = jnp.dot(x, w_ref[...], preferred_element_type=jnp.float32)
    o_ref[...] = (y * scale_ref[...] + shift_ref[...]).astype(o_ref.dtype)


def decoder_forward(x_nchw, weight, bias, gamma, beta, *, tile_m=1024,
                    out_dtype=jnp.float32):
    """x_nchw: (N, Cin, H, W). Returns (N, Cout, 2H, 2W), matching the PyTorch Decoder forward.

    `bias` is accepted for API parity but unused: it is exactly cancelled by the training-mode
    BatchNorm mean subtraction.  `out_dtype=jnp.bfloat16` halves the dominant store traffic and
    is the recommended setting when the result feeds the next (bf16) decoder stage.
    """
    del bias
    n, cin, h, w = x_nchw.shape
    cout = weight.shape[1]

    # Pad Cout so c4 = 4*Cout_pad is a multiple of 128 -> unmasked lane-dense stores.
    cout_pad = _round_up(cout, 32)
    c4 = 4 * cout_pad
    m = n * h * w

    # NCHW -> (N*H*W, Cin) rows; weight (Cin, Cout, 2, 2) -> (Cin, c4), col = (ki*2+kj)*Cout_pad+co.
    # TODO(synk): in a channels-last network this transpose + cast disappears.
    x_rows = jnp.transpose(x_nchw, (0, 2, 3, 1)).reshape(m, cin).astype(jnp.bfloat16)
    w2 = jnp.transpose(weight, (0, 2, 3, 1))                       # (Cin, 2, 2, Cout)
    if cout_pad != cout:
        w2 = jnp.pad(w2, ((0, 0), (0, 0), (0, 0), (0, cout_pad - cout)))
    w2 = w2.reshape(cin, c4).astype(jnp.bfloat16)

    # Row tiling: bound VMEM independent of M, force an EVEN number of tiles so the "parallel"
    # grid axis splits evenly across the two TensorCores on v7x.  Multiple of 16 rows so bf16
    # tiles stay cleanly packed.
    nblk = max(2, pl.cdiv(m, max(16, tile_m)))
    if nblk % 2:
        nblk += 1
    tile_m = _round_up(pl.cdiv(m, nblk), 16)
    m_pad = nblk * tile_m
    if m_pad != m:
        x_rows = jnp.pad(x_rows, ((0, m_pad - m), (0, 0)))   # zero rows -> contribute 0 to sums

    cparams = pltpu.CompilerParams(
        dimension_semantics=("parallel",),           # shard row tiles across TCs on v7x
        vmem_limit_bytes=48 * 1024 * 1024,           # explicit; safe on v5e/v6e/v7x (<=64 MiB)
    )

    # ---- pass 1: per-tile partial statistics only (no y round trip to HBM) ------------------
    stats = pl.pallas_call(
        stats_kernel,
        out_shape=jax.ShapeDtypeStruct((nblk, 2, c4), jnp.float32),
        grid=(nblk,),
        in_specs=[
            pl.BlockSpec((tile_m, cin), lambda i: (i, 0)),
            pl.BlockSpec((cin, c4), lambda i: (0, 0)),        # resident weight
        ],
        out_specs=pl.BlockSpec((1, 2, c4), lambda i: (i, 0, 0)),
        compiler_params=cparams,
    )(x_rows, w2)

    # ---- tiny JAX reduction: combine per-tile partials -> BN scale/shift --------------------
    count = jnp.float32(m * 4)                                   # true per-channel element count
    sums = stats[:, 0, :].sum(axis=0).reshape(4, cout_pad).sum(axis=0)
    sqs = stats[:, 1, :].sum(axis=0).reshape(4, cout_pad).sum(axis=0)
    mean = sums / count
    var = jnp.maximum(sqs / count - mean * mean, 0.0)            # biased var, clamped >= 0
    gamma_p = jnp.pad(gamma.astype(jnp.float32), (0, cout_pad - cout))
    beta_p = jnp.pad(beta.astype(jnp.float32), (0, cout_pad - cout))
    scale = gamma_p * lax.rsqrt(var + EPS)
    shift = beta_p - mean * scale
    scale4 = jnp.tile(scale, 4).reshape(1, c4)
    shift4 = jnp.tile(shift, 4).reshape(1, c4)

    # ---- pass 2: recompute matmul + fused normalize, full-width lane-dense stores -----------
    out_rows = pl.pallas_call(
        normalize_kernel,
        out_shape=jax.ShapeDtypeStruct((m_pad, c4), out_dtype),
        grid=(nblk,),
        in_specs=[
            pl.BlockSpec((tile_m, cin), lambda i: (i, 0)),
            pl.BlockSpec((cin, c4), lambda i: (0, 0)),        # resident weight
            pl.BlockSpec((1, c4), lambda i: (0, 0)),
            pl.BlockSpec((1, c4), lambda i: (0, 0)),
        ],
        out_specs=pl.BlockSpec((tile_m, c4), lambda i: (i, 0)),
        compiler_params=cparams,
    )(x_rows, w2, scale4, shift4)

    out_rows = out_rows[:m]
    # (M, c4) -> (N, H, W, ki, kj, Cout_pad) -> strip pad -> (N, Cout, 2H, 2W) depth-to-space.
    # TODO(synk): fold this into the pass-2 output index_map (NHWC write) in a channels-last net.
    out = out_rows.reshape(n, h, w, 2, 2, cout_pad)[..., :cout]
    out = jnp.transpose(out, (0, 5, 1, 3, 2, 4)).reshape(n, cout, 2 * h, 2 * w)
    return out


def decoder_reference(x_nchw, weight, bias, gamma, beta, *, matmul_dtype=jnp.float32):
    """Pure-JAX reference of the PyTorch forward (training-mode BatchNorm, bias included)."""
    xr = jnp.maximum(x_nchw, 0.0).astype(matmul_dtype)
    wc = weight.astype(matmul_dtype)
    # deconv: out[n,co,2i+ki,2j+kj] = sum_ci xr[n,ci,i,j] * W[ci,co,ki,kj] + b[co]
    y = jnp.einsum('ncij,cokl->noikjl', xr, wc, preferred_element_type=jnp.float32)
    n, cout, h, _, w_, _ = y.shape
    y = y.reshape(n, cout, 2 * h, 2 * w_) + bias.reshape(1, cout, 1, 1)
    mean = jnp.mean(y, axis=(0, 2, 3), keepdims=True)
    var = jnp.mean((y - mean) ** 2, axis=(0, 2, 3), keepdims=True)
    yn = (y - mean) * lax.rsqrt(var + EPS)
    return yn * gamma.reshape(1, cout, 1, 1) + beta.reshape(1, cout, 1, 1)


if __name__ == "__main__":
    key = jax.random.PRNGKey(0)
    k_x, k_w, k_b, k_g, k_beta = jax.random.split(key, 5)

    N, Cin, Cout, H, W = 2, 16, 8, 10, 10

    x = jax.random.normal(k_x, (N, Cin, H, W), dtype=jnp.float32)
    # ConvTranspose2d weight shape: (in_channels, out_channels, 2, 2)
    weight = 0.1 * jax.random.normal(k_w, (Cin, Cout, 2, 2), dtype=jnp.float32)
    bias = 0.1 * jax.random.normal(k_b, (Cout,), dtype=jnp.float32)
    gamma = 1.0 + 0.1 * jax.random.normal(k_g, (Cout,), dtype=jnp.float32)
    beta = 0.1 * jax.random.normal(k_beta, (Cout,), dtype=jnp.float32)

    # tile_m=64 so the test exercises multiple row tiles (even count), the zero-padded ragged
    # tail (M = 200 -> padded), the Cout->32 channel padding (c4 = 128) and the cross-tile
    # partial-sum reduction.
    out = decoder_forward(x, weight, bias, gamma, beta, tile_m=64, out_dtype=jnp.float32)
    out = jax.block_until_ready(out)
    assert out.shape == (N, Cout, 2 * H, 2 * W), out.shape

    # Tight check vs a reference that also feeds bf16 operands to the matmul (f32 accumulate):
    # isolates kernel correctness (dropped bias / blocked stats / channel padding) from rounding.
    ref16 = decoder_reference(x, weight, bias, gamma, beta, matmul_dtype=jnp.bfloat16)
    err16 = float(jnp.max(jnp.abs(out - ref16)))
    assert err16 < 2e-3, err16

    # Sanity check vs the full-f32 PyTorch-equivalent reference (gap = bf16 MXU operands;
    # normalized outputs have ~unit variance so this is an absolute-scale bound).
    ref32 = decoder_reference(x, weight, bias, gamma, beta, matmul_dtype=jnp.float32)
    err32 = float(jnp.max(jnp.abs(out - ref32)))
    assert err32 < 8e-2, err32

    # bf16 output path (recommended for the end-to-end network): halves store traffic.
    out_bf = decoder_forward(x, weight, bias, gamma, beta, tile_m=64, out_dtype=jnp.bfloat16)
    out_bf = jax.block_until_ready(out_bf)
    err_bf = float(jnp.max(jnp.abs(out_bf.astype(jnp.float32) - ref16)))
    assert err_bf < 5e-2, err_bf

    print("KERNEL_OK")
</pallas_src>

<mosaic_0001>
module attributes {stable_mosaic.version = 11 : i64} {
  func.func @stats_kernel(%arg0: i32, %arg1: memref<64x16xbf16, #tpu.memory_space<vmem>>, %arg2: memref<16x128xbf16, #tpu.memory_space<vmem>>, %arg3: memref<1x2x128xf32, #tpu.memory_space<vmem>>) attributes {dimension_semantics = [#tpu.dimension_semantics<parallel>], iteration_bounds = array<i64: 4>, scalar_prefetch = 0 : i64, scratch_operands = 0 : i64, tpu.core_type = #tpu.core_type<tc>, window_params = [{transform_indices = @transform_0, window_bounds = array<i64: 64, 16>}, {pipeline_mode = #tpu.pipeline_mode<synchronous>, transform_indices = @transform_1, window_bounds = array<i64: 16, 128>}, {transform_indices = @transform_2, window_bounds = array<i64: 1, 2, 128>}]} {
    %c0 = arith.constant 0 : index
    %c0_0 = arith.constant 0 : index
    %0 = vector.load %arg1[%c0, %c0_0] : memref<64x16xbf16, #tpu.memory_space<vmem>>, vector<64x16xbf16>
    %cst = arith.constant 0.000000e+00 : bf16
    %1 = vector.broadcast %cst : bf16 to vector<64x16xbf16>
    %2 = arith.maximumf %0, %1 : vector<64x16xbf16>
    %c0_1 = arith.constant 0 : index
    %c0_2 = arith.constant 0 : index
    %3 = vector.load %arg2[%c0_1, %c0_2] : memref<16x128xbf16, #tpu.memory_space<vmem>>, vector<16x128xbf16>
    %cst_3 = arith.constant dense<0.000000e+00> : vector<64x128xf32>
    %4 = tpu.matmul %2, %3, %cst_3 {dimension_numbers = #tpu.dot_dimension_numbers<[1], [0], [0], [1], [0, 0, 1, 1], [], []>} : vector<64x16xbf16>, vector<16x128xbf16>, vector<64x128xf32> -> vector<64x128xf32>
    %cst_4 = arith.constant dense<0.000000e+00> : vector<128xf32>
    %5 = vector.multi_reduction <add>, %4, %cst_4 [0] : vector<64x128xf32> to vector<128xf32>
    %6 = vector.shape_cast %5 : vector<128xf32> to vector<1x128xf32>
    %7 = arith.mulf %4, %4 : vector<64x128xf32>
    %cst_5 = arith.constant dense<0.000000e+00> : vector<128xf32>
    %8 = vector.multi_reduction <add>, %7, %cst_5 [0] : vector<64x128xf32> to vector<128xf32>
    %9 = vector.shape_cast %8 : vector<128xf32> to vector<1x128xf32>
    %10 = tpu.concatenate %6, %9 in 0 : vector<1x128xf32>, vector<1x128xf32> -> vector<2x128xf32>
    %11 = vector.shape_cast %10 : vector<2x128xf32> to vector<1x2x128xf32>
    %c0_6 = arith.constant 0 : index
    %c0_7 = arith.constant 0 : index
    %c0_8 = arith.constant 0 : index
    %12 = vector.load %arg3[%c0_6, %c0_7, %c0_8] : memref<1x2x128xf32, #tpu.memory_space<vmem>>, vector<1x2x128xf32>
    tpu.vector_store %arg3[%c0_6, %c0_7, %c0_8], %11 {strides = array<i32>} : memref<1x2x128xf32, #tpu.memory_space<vmem>>, vector<1x2x128xf32>,
    return
  }
  func.func @transform_0(%arg0: i32) -> (i32, i32) {
    %c0_i32 = arith.constant 0 : i32
    %c0_i32_0 = arith.constant 0 : i32
    return %arg0, %c0_i32 : i32, i32
  }
  func.func @transform_1(%arg0: i32) -> (i32, i32) {
    %c0_i32 = arith.constant 0 : i32
    %c0_i32_0 = arith.constant 0 : i32
    %c0_i32_1 = arith.constant 0 : i32
    return %c0_i32, %c0_i32_0 : i32, i32
  }
  func.func @transform_2(%arg0: i32) -> (i32, i32, i32) {
    %c0_i32 = arith.constant 0 : i32
    %c0_i32_0 = arith.constant 0 : i32
    %c0_i32_1 = arith.constant 0 : i32
    return %arg0, %c0_i32, %c0_i32_0 : i32, i32, i32
  }
}

</mosaic_0001>

<llo_original>
// kernel: tpu_custom_call.1
$region0: #{tpu_custom_call.1}
  #allocation0 [shape = 'u32[]', space=smem, size = 0x4, offset = 0x4, fixed_abs, tag = 'smem constant byte address 0x4 - core index']
  #allocation1 [shape = 'u32[144,128]{1,0:T(1,128)}', space=vmem, size = 0x12000, scoped, tag = 'internal scratch']
  %s0 = inlined_call_operand.vmem [shape: bf16[256,16], index: 0, kind: input, shape index: {}]
  %s1 = inlined_call_operand.vmem [shape: bf16[16,128], index: 1, kind: input, shape index: {}]
  %s2 = inlined_call_operand.hbm [shape: f32[4,2,128], index: 2, kind: output, shape index: {}]
  %s3 = sld [smem:[#allocation0]]
  $region41: #{tpu_custom_call.1} parent=0
    _
  %s5 = ssub.s32 1, %s3
  %s6 = scalar_select 0, %s5, %s3
  $region1: #{tpu_custom_call.1} parent=0
    #allocation2 [shape = 'u8[2048]{0}', space=vmem, size = 0x800, scoped, tag = 'output window, operand 0']
    #allocation3 [shape = 's32[2]{0}', space=sflag, size = 0x8, scoped, tag = 'scoped memory for tpu_custom_call.1']
    %7 = vsyncpa [#allocation3], 0
    %s8 = scalar_lea.sflag [#allocation3], 1
    %9 = vsyncpa %s8, 0
    loop: start=0, step=1, limit=6
    $region2: #{tpu_custom_call.1} parent=1 // loop_pre_header
      _
    $region3: #{tpu_custom_call.1} parent=1 // loop_header
      %s11 = sphi 0, %s15
      %p12 = scmp.ge.s32.totalorder %s11, 6
      %s21 = sphi 0, %s23
      %s24 = sphi 0, %s21
      %s25 = sphi 0, %s24
      %s41 = sphi 0, %s25
      %s45 = sphi 0, %s45
      %s47 = sphi 0, %s45
      %s48 = sphi 0, %s47
      %s62 = sphi 0, %s48
      %s68 = sphi 0, %s70
      %s71 = sphi 0, %s68
      %s72 = sphi 0, %s71
      %s88 = sphi 0, %s72
    $region4: #{tpu_custom_call.1} parent=1 // loop_header_branch
      %14 = sbr.rel (%p12) target = $region8
    $region5: #{tpu_custom_call.1} parent=1 // loop_body
      %s16 = ssub.s32 %s11, 1
      %s17 = ssub.s32 %s11, 2
      %s18 = sadd.s32 %s11, 1
      %s19 = ssub.s32 %s11, %s18
      %p20 = scmp.eq.s32.totalorder %s19, 0
      %s22 = sadd.s32 %s21, 1
      %s23 = scalar_select %p20, %s21, %s22
      %p26 = pneg %p20
      %p27 = scmp.eq.s32.totalorder %s11, 3
      %p28 = por %p26, %p27
      %p29 = scmp.ne.s32.totalorder %s21, %s24
      %p30 = scmp.eq.s32.totalorder %s11, 0
      %p31 = por %p29, %p30
      %p32 = scmp.ne.s32.totalorder %s21, %s24
      %p33 = scmp.eq.s32.totalorder %s16, 3
      %p34 = por %p32, %p33
      %p35 = scmp.ne.s32.totalorder %s24, %s25
      %p36 = scmp.eq.s32.totalorder %s16, 0
      %p37 = por %p35, %p36
      %p38 = scmp.ne.s32.totalorder %s24, %s25
      %p39 = scmp.eq.s32.totalorder %s17, 3
      %p40 = por %p38, %p39
      %p42 = scmp.ne.s32.totalorder %s25, %s41
      %p43 = scmp.eq.s32.totalorder %s17, 0
      %p44 = por %p42, %p43
      %s46 = sadd.s32 %s45, 1
      %p49 = scmp.eq.s32.totalorder %s11, 3
      %p50 = scmp.ne.s32.totalorder %s45, %s47
      %p51 = scmp.eq.s32.totalorder %s11, 0
      %p52 = por %p50, %p51
      %p53 = scmp.ne.s32.totalorder %s45, %s47
      %p54 = scmp.eq.s32.totalorder %s16, 3
      %p55 = por %p53, %p54
      %p56 = scmp.ne.s32.totalorder %s47, %s48
      %p57 = scmp.eq.s32.totalorder %s16, 0
      %p58 = por %p56, %p57
      %p59 = scmp.ne.s32.totalorder %s47, %s48
      %p60 = scmp.eq.s32.totalorder %s17, 3
      %p61 = por %p59, %p60
      %p63 = scmp.ne.s32.totalorder %s48, %s62
      %p64 = scmp.eq.s32.totalorder %s17, 0
      %p65 = por %p63, %p64
      %s66 = ssub.s32 %s11, %s18
      %p67 = scmp.eq.s32.totalorder %s66, 0
      %s69 = sadd.s32 %s68, 1
      %s70 = scalar_select %p67, %s68, %s69
      %p73 = pneg %p67
      %p74 = scmp.eq.s32.totalorder %s11, 3
      %p75 = por %p73, %p74
      %p76 = scmp.ne.s32.totalorder %s68, %s71
      %p77 = scmp.eq.s32.totalorder %s11, 0
      %p78 = por %p76, %p77
      %p79 = scmp.ne.s32.totalorder %s68, %s71
      %p80 = scmp.eq.s32.totalorder %s16, 3
      %p81 = por %p79, %p80
      %p82 = scmp.ne.s32.totalorder %s71, %s72
      %p83 = scmp.eq.s32.totalorder %s16, 0
      %p84 = por %p82, %p83
      %p85 = scmp.ne.s32.totalorder %s71, %s72
      %p86 = scmp.eq.s32.totalorder %s17, 3
      %p87 = por %p85, %p86
      %p89 = scmp.ne.s32.totalorder %s72, %s88
      %p90 = scmp.eq.s32.totalorder %s17, 0
      %p91 = por %p89, %p90
      %p92 = scmp.le.s32.totalorder 1, %s11
      %p93 = scmp.lt.s32.totalorder %s11, 5
      %p94 = pnand %p92, %p93
      %p95 = pneg %p94
      // Predicated region
      $region9: #{tpu_custom_call.1} parent=5 // pred_check
        _
      $region10: #{tpu_custom_call.1} parent=5 // pred_check_branch
        %97 = sbr.rel (%p94) target = $region12
      $region11: #{tpu_custom_call.1} parent=5 // pred_region
        %s98 = ssub.s32 %s11, 1
        // Predicated region
        $region13: #{tpu_custom_call.1} parent=11 // pred_check
          %p99 = pneg %p58
        $region14: #{tpu_custom_call.1} parent=11 // pred_check_branch
          %101 = sbr.rel (%p99) target = $region16
        $region15: #{tpu_custom_call.1} parent=11 // pred_region
          _
        $region16: #{tpu_custom_call.1} parent=11 // pred_fallthru
          _
      $region12: #{tpu_custom_call.1} parent=5 // pred_fallthru
        _
      %p102 = scmp.lt.s32.totalorder %s11, 4
      // Predicated region
      $region17: #{tpu_custom_call.1} parent=5 // pred_check
        %p103 = pneg %p102
      $region18: #{tpu_custom_call.1} parent=5 // pred_check_branch
        %105 = sbr.rel (%p103) target = $region20
      $region19: #{tpu_custom_call.1} parent=5 // pred_region
        // Predicated region
        $region21: #{tpu_custom_call.1} parent=19 // pred_check
          %p106 = pneg %p31
        $region22: #{tpu_custom_call.1} parent=19 // pred_check_branch
          %108 = sbr.rel (%p106) target = $region24
        $region23: #{tpu_custom_call.1} parent=19 // pred_region
          %s109 = smul.u32 8, %s11
          %p110 = scmp.lt.s32.totalorder %s109, 31
          %s111 = scalar_select %p110, %s109, 31
          %s112 = smul.addr %s111, 4
          %s113 = scalar_lea.vmem %s0, %s112
          %s114 = smul.u32 8, %s11
        $region24: #{tpu_custom_call.1} parent=19 // pred_fallthru
          _
      $region20: #{tpu_custom_call.1} parent=5 // pred_fallthru
        _
      %p115 = scmp.le.s32.totalorder 1, %s11
      %p116 = scmp.lt.s32.totalorder %s11, 5
      %p117 = pnand %p115, %p116
      %p118 = pneg %p117
      // Predicated region
      $region25: #{tpu_custom_call.1} parent=5 // pred_check
        _
      $region26: #{tpu_custom_call.1} parent=5 // pred_check_branch
        %120 = sbr.rel (%p117) target = $region28
      $region27: #{tpu_custom_call.1} parent=5 // pred_region
        %s121 = ssub.s32 %s11, 1
        %s122 = smul.u32 8, %s16
        %p123 = scmp.lt.s32.totalorder %s122, 31
        %s124 = scalar_select %p123, %s122, 31
        %s125 = smul.addr %s124, 4
        %s126 = scalar_lea.vmem %s0, %s125
        %p127 = pneg %p37
        %p128 = pneg %p34
        %p129 = pneg %p58
        %p130 = pneg %p55
        %p131 = pneg %p84
        %p132 = pneg %p81
        %s133 = sand.u32 %s71, 1
        %s134 = scalar_lea.sflag [#allocation3], %s133
        %s135 = sand.u32 %s71, 1
        %s136 = smul.addr %s135, 2
        %s137 = scalar_lea.vmem [#allocation2], %s136
        %s138 = smul.u32 8, %s16
        %p139 = scmp.lt.s32.totalorder %s138, 31
        %s140 = scalar_select %p139, %s138, 31
        %s141 = smul.addr %s140, 4
        %s142 = scalar_lea.vmem %s0, %s141
        %s143 = smul.u32 8, %s16
        %v145 = vld [vmem:[%s142] sm:$0xf]
        %v146 = vld [vmem:[%s142 + $0x4] sm:$0xf]
        %v147 = vld [vmem:[%s142 + $0x8] sm:$0xf]
        %v148 = vld [vmem:[%s142 + $0xc] sm:$0xf]
        %v149 = vld [vmem:[%s142 + $0x10] sm:$0xf]
        %v150 = vld [vmem:[%s142 + $0x14] sm:$0xf]
        %v151 = vld [vmem:[%s142 + $0x18] sm:$0xf]
        %v152 = vld [vmem:[%s142 + $0x1c] sm:$0xf]
        %v153 = vmax.bf16 %v145, 0
        %v154 = vmax.bf16 %v146, 0
        %v155 = vmax.bf16 %v147, 0
        %v156 = vmax.bf16 %v148, 0
        %v157 = vmax.bf16 %v149, 0
        %v158 = vmax.bf16 %v150, 0
        %v159 = vmax.bf16 %v151, 0
        %v160 = vmax.bf16 %v152, 0
        %v161 = vld [vmem:[%s1] sm:$0xf]
        %v162 = vld [vmem:[%s1 + $0x4] sm:$0xf]
        %v171 = vunpack.c.l.b16 %v153
        %v172 = vunpack.c.l.b16 %v154
        %v173 = vunpack.c.l.b16 %v155
        %v174 = vunpack.c.l.b16 %v156
        %v175 = vunpack.c.l.b16 %v157
        %v176 = vunpack.c.l.b16 %v158
        %v177 = vunpack.c.l.b16 %v159
        %v178 = vunpack.c.l.b16 %v160
        %v179 = vpack.c.b16 %v172, %v171
        %v180 = vpack.c.b16 %v174, %v173
        %v181 = vpack.c.b16 %v176, %v175
        %v182 = vpack.c.b16 %v178, %v177
        %v185 = vunpack.c.l.b16 %v161
        %v186 = vunpack.c.l.b16 %v162
        %v187 = vpack.c.b16 %v186, %v185
        %vm189 = vcmask 130048
        %v191 = vsel %vm189, %v179, 0
        %v194 = vsel %vm189, %v180, 0
        %v197 = vsel %vm189, %v181, 0
        %v200 = vsel %vm189, %v182, 0
        %202 = vmatprep.subr.bf16.mxu0 0
        %203 = vmatpush1.bf16.msra.mxu0 %v187
        %204 = vmatprep.subr.bf16.mxu0 0
        %205 = vmatpush1.bf16.msra.mxu0 0
        %206 = vmatprep.subr.bf16.mxu0 0
        %207 = vmatpush1.bf16.msra.mxu0 0
        %208 = vmatprep.subr.bf16.mxu0 0
        %209 = vmatpush1.bf16.msra.mxu0 0
        %210 = vmatprep.subr.bf16.mxu0 0
        %211 = vmatpush1.bf16.msra.mxu0 0
        %212 = vmatprep.subr.bf16.mxu0 0
        %213 = vmatpush1.bf16.msra.mxu0 0
        %214 = vmatprep.subr.bf16.mxu0 0
        %215 = vmatpush1.bf16.msra.mxu0 0
        %216 = vmatprep.subr.bf16.mxu0 0
        %217 = vmatpush1.bf16.msra.mxu0 0
        %218 = vmatprep.subr.bf16.mxu0 0
        %219 = vmatpush1.bf16.msra.mxu0 0
        %220 = vmatprep.subr.bf16.mxu0 0
        %221 = vmatpush1.bf16.msra.mxu0 0
        %222 = vmatprep.subr.bf16.mxu0 0
        %223 = vmatpush1.bf16.msra.mxu0 0
        %224 = vmatprep.subr.bf16.mxu0 0
        %225 = vmatpush1.bf16.msra.mxu0 0
        %226 = vmatprep.subr.bf16.mxu0 0
        %227 = vmatpush1.bf16.msra.mxu0 0
        %228 = vmatprep.subr.bf16.mxu0 0
        %229 = vmatpush1.bf16.msra.mxu0 0
        %230 = vmatprep.subr.bf16.mxu0 0
        %231 = vmatpush1.bf16.msra.mxu0 0
        %232 = vmatprep.subr.bf16.mxu0 0
        %233 = vmatpush1.bf16.msra.mxu0 0
        %234 = vmatprep.mubr.bf16.mxu0 0
        %235 = vmatmul.mubr.bf16.gmra.mrb[0].mxu0 %v191
        %v236 = vpop.f32.mrb[0].mxu0
        %v237 = vadd.f32 0.0, %v236
        %v238 = vpop.f32.mrb[0].mxu0
        %v239 = vpop.f32.mrb[0].mxu0
        %v240 = vadd.f32 0.0, %v239
        %v241 = vpop.f32.mrb[0].mxu0
        %242 = vmatprep.mubr.bf16.mxu0 0
        %243 = vmatmul.mubr.bf16.gmra.mrb[0].mxu0 %v194
        %v244 = vpop.f32.mrb[0].mxu0
        %v245 = vadd.f32 0.0, %v244
        %v246 = vpop.f32.mrb[0].mxu0
        %v247 = vpop.f32.mrb[0].mxu0
        %v248 = vadd.f32 0.0, %v247
        %v249 = vpop.f32.mrb[0].mxu0
        %250 = vmatprep.mubr.bf16.mxu0 0
        %251 = vmatmul.mubr.bf16.gmra.mrb[0].mxu0 %v197
        %v252 = vpop.f32.mrb[0].mxu0
        %v253 = vadd.f32 0.0, %v252
        %v254 = vpop.f32.mrb[0].mxu0
        %v255 = vpop.f32.mrb[0].mxu0
        %v256 = vadd.f32 0.0, %v255
        %v257 = vpop.f32.mrb[0].mxu0
        %258 = vmatprep.mubr.bf16.mxu0 0
        %259 = vmatmul.mubr.bf16.gmra.mrb[0].mxu0 %v200
        %v260 = vpop.f32.mrb[0].mxu0
        %v261 = vadd.f32 0.0, %v260
        %v262 = vpop.f32.mrb[0].mxu0
        %v263 = vpop.f32.mrb[0].mxu0
        %v264 = vadd.f32 0.0, %v263
        %v265 = vpop.f32.mrb[0].mxu0
        %266 = vdwg.mxu0
        %v267 = vadd.f32 %v237, %v240
        %v268 = vadd.f32 %v267, %v245
        %v269 = vadd.f32 %v268, %v248
        %v270 = vadd.f32 %v269, %v253
        %v271 = vadd.f32 %v270, %v256
        %v272 = vadd.f32 %v271, %v261
        %v273 = vadd.f32 %v272, %v264
        %v274 = vrot.slane %v273, 4
        %v275 = vadd.f32 %v273, %v274
        %v276 = vrot.slane %v275, 2
        %v277 = vadd.f32 %v275, %v276
        %v278 = vrot.slane %v277, 1
        %v279 = vadd.f32 %v277, %v278
        %v280 = vmul.f32 %v237, %v237
        %v281 = vmul.f32 %v240, %v240
        %v282 = vmul.f32 %v245, %v245
        %v283 = vmul.f32 %v248, %v248
        %v284 = vmul.f32 %v253, %v253
        %v285 = vmul.f32 %v256, %v256
        %v286 = vmul.f32 %v261, %v261
        %v287 = vmul.f32 %v264, %v264
        %v288 = vadd.f32 %v280, %v281
        %v289 = vadd.f32 %v288, %v282
        %v290 = vadd.f32 %v289, %v283
        %v291 = vadd.f32 %v290, %v284
        %v292 = vadd.f32 %v291, %v285
        %v293 = vadd.f32 %v292, %v286
        %v294 = vadd.f32 %v293, %v287
        %v295 = vrot.slane %v294, 4
        %v296 = vadd.f32 %v294, %v295
        %v297 = vrot.slane %v296, 2
        %v298 = vadd.f32 %v296, %v297
        %v299 = vrot.slane %v298, 1
        %v300 = vadd.f32 %v298, %v299
        %vm301 = vcmask 1040384
        %v302 = vsel %vm301, %v279, %v300
        %303 = vst [vmem:[%s137] sm:$0x3] %v302
        %s304 = sand.u32 %s71, 1
        %s305 = scalar_lea.sflag [#allocation3], %s304
        %s306 = sand.u32 %s71, 1
        %s307 = smul.addr %s306, 2
        %s308 = scalar_lea.vmem [#allocation2], %s307
        // Predicated region
        $region29: #{tpu_custom_call.1} parent=27 // pred_check
          %p309 = pneg %p81
        $region30: #{tpu_custom_call.1} parent=27 // pred_check_branch
          %311 = sbr.rel (%p309) target = $region32
        $region31: #{tpu_custom_call.1} parent=27 // pred_region
          %s313 = ssub.s32 32, 32
          %314 = vsyncadd %s305, %s313
          %s315 = smul.addr %s16, 32
          %s316 = scalar_lea.hbm %s2, %s315
          %s318 = sshll.u32 %s308, 4
          %s319 = int_to_ptr.vmem [resolvable:$true] %s318
          %321 = dma.vmem_to_hbm [thread:$0]  %s319, 32, %s316, %s305
        $region32: #{tpu_custom_call.1} parent=27 // pred_fallthru
          _
      $region28: #{tpu_custom_call.1} parent=5 // pred_fallthru
        _
      %p322 = scmp.le.s32.totalorder 2, %s11
      // Predicated region
      $region33: #{tpu_custom_call.1} parent=5 // pred_check
        %p323 = pneg %p322
      $region34: #{tpu_custom_call.1} parent=5 // pred_check_branch
        %325 = sbr.rel (%p323) target = $region36
      $region35: #{tpu_custom_call.1} parent=5 // pred_region
        %s326 = ssub.s32 %s11, 2
        // Predicated region
        $region37: #{tpu_custom_call.1} parent=35 // pred_check
          %p327 = pneg %p87
        $region38: #{tpu_custom_call.1} parent=35 // pred_check_branch
          %329 = sbr.rel (%p327) target = $region40
        $region39: #{tpu_custom_call.1} parent=35 // pred_region
          %s330 = sand.u32 %s72, 1
          %s331 = scalar_lea.sflag [#allocation3], %s330
          %s332 = sand.u32 %s72, 1
          %s333 = smul.addr %s332, 2
          %s334 = scalar_lea.vmem [#allocation2], %s333
          %335 = dma.done %s331, 32
        $region40: #{tpu_custom_call.1} parent=35 // pred_fallthru
          _
      $region36: #{tpu_custom_call.1} parent=5 // pred_fallthru
        _
    $region6: #{tpu_custom_call.1} parent=1 // loop_footer
      %s15 = sadd.s32 1, %s11
    $region7: #{tpu_custom_call.1} parent=1 // loop_footer_branch
      %10 = sbr.rel target = $region3
    $region8: #{tpu_custom_call.1} parent=1 // loop_exit
      _
    %336 = vsyncpa [#allocation3], 1
    %s337 = scalar_lea.sflag [#allocation3], 1
    %338 = vsyncpa %s337, 1

</llo_original>
